<compile_context>
chip_gen: v5e
topology: v5e:2x2
jax: 0.10.0
libtpu: 0.0.40
codegen_flags: <defaults>
</compile_context>

<pallas_src>
import jax
import jax.numpy as jnp
from jax import lax
from jax.experimental import pallas as pl
from jax.experimental.pallas import tpu as pltpu

_EPS = 1e-6


# --------------------------------------------------------------------------
# Generation-aware VMEM budgets
# --------------------------------------------------------------------------
def _vmem_capacity_bytes():
    """Physical VMEM of the current TPU generation (conservative fallback)."""
    try:
        info = pltpu.get_tpu_info()
        for attr in ("vmem_capacity_bytes", "vmem_bytes", "vmem_capacity"):
            v = getattr(info, attr, None)
            if isinstance(v, int) and v > 0:
                return v
    except Exception:
        pass
    return 64 * 1024 * 1024          # assume smallest (v7x-like) if unknown


def _budgets():
    cap = _vmem_capacity_bytes()
    if cap >= 100 * 1024 * 1024:     # v5e / v6e: 128 MiB physical VMEM
        return {"k1_w": 64 << 20, "k2_x": 48 << 20, "limit": 96 << 20}
    # v7x: 64 MiB physical VMEM -- stay conservative
    return {"k1_w": 36 << 20, "k2_x": 20 << 20, "limit": 48 << 20}


# --------------------------------------------------------------------------
# Kernel 1: modulation projection  mod^T = W @ SiLU(emb)^T + b
# --------------------------------------------------------------------------
def _modulation_kernel(silu_ref, w_ref, b_ref, mod_ref):
    # silu_ref: (D, B) resident across the column grid
    # w_ref:    (TN, D) weight slab   b_ref: (TN, 1)   mod_ref: (TN, B)
    # Canonical contraction: LHS last dim x RHS second-to-last -> the 10s-of-MiB
    # weight slab is only streamed, never transposed, on any generation.
    acc = lax.dot_general(w_ref[...], silu_ref[...],
                          (((1,), (0,)), ((), ())),
                          preferred_element_type=jnp.float32)
    mod_ref[...] = (acc + b_ref[...].astype(jnp.float32)).astype(mod_ref.dtype)


def _choose_col_steps(n3p, d, itemsize, budget):
    """Number of column-grid steps: fewest (prefer even) slabs fitting budget."""
    nblocks = n3p // 128
    fitting = []
    for nsteps in range(1, nblocks + 1):
        if nblocks % nsteps:
            continue
        tn = n3p // nsteps
        if 2 * tn * d * itemsize <= budget:     # double-buffered weight slab
            fitting.append(nsteps)
    if not fitting:
        return nblocks                           # tn = 128 (smallest legal slab)
    even = [n for n in fitting if n >= 2 and n % 2 == 0]
    return even[0] if even else fitting[0]


# --------------------------------------------------------------------------
# Kernel 2: affine-free LayerNorm + adaLN modulation
# --------------------------------------------------------------------------
def _norm_modulate_kernel(x_ref, shift_ref, scale_ref, out_ref):
    # x_ref/out_ref: (1, TS, D); shift_ref/scale_ref: (1, 1, D)
    x = x_ref[...].astype(jnp.float32)
    mean = jnp.mean(x, axis=-1, keepdims=True)
    meansq = jnp.mean(x * x, axis=-1, keepdims=True)
    var = jnp.maximum(meansq - mean * mean, 0.0)   # one-pass: no 'centered' temp
    inv = lax.rsqrt(var + _EPS)
    scale = scale_ref[...].astype(jnp.float32)     # (1, 1, D) broadcasts over TS
    shift = shift_ref[...].astype(jnp.float32)
    out_ref[...] = ((x - mean) * inv * (1.0 + scale) + shift).astype(out_ref.dtype)


def _choose_seq_tile(b, s, d, x_itemsize, budget, target=1024):
    """Sequence tile (multiple of 8, divides S) fitting the VMEM budget."""
    if s <= 8:
        return s
    # in + out, double-buffered, plus ~2 f32 full-tile temps inside the body
    bytes_per_row = 4 * d * x_itemsize + 8 * d
    upper = min(s, target, max(8, budget // bytes_per_row))
    if b == 1 and s >= 16:
        upper = min(upper, max(8, s // 2))         # >=2 grid steps for megacore
    ts = (upper // 8) * 8
    while ts >= 8 and s % ts:
        ts -= 8
    return ts if ts >= 8 and s % ts == 0 else s    # ragged S: take it whole


# --------------------------------------------------------------------------
# Wrapper
# --------------------------------------------------------------------------
def ada_layer_norm_zero_single(x, emb, weight, bias, *, stream_dtype=None):
    """x: (B, S, D), emb: (B, D), weight: (3D, D), bias: (3D,).

    Returns (x_out (B, S, D), gate_msa (B, D)) matching the PyTorch forward.
    Pass stream_dtype=jnp.bfloat16 to stream the projection weight in bf16
    (halves kernel-1 HBM traffic); accumulation stays float32.
    """
    B, S, D = x.shape
    N3 = 3 * D
    budgets = _budgets()
    mod_dtype = jnp.promote_types(emb.dtype, weight.dtype)

    # Optionally stream the big weight narrower; f32 accumulate on the MXU.
    w_stream = weight if stream_dtype is None else weight.astype(stream_dtype)

    # SiLU(emb) hoisted here (tiny XLA op) and pre-transposed to (D, B).
    e = emb.astype(jnp.float32)
    silu_t = jnp.transpose(e * jax.nn.sigmoid(e)).astype(w_stream.dtype)

    # Pad the 3D output rows to a 128 multiple so every weight slab is a legal
    # (8,128)-aligned block (never a single whole-weight block at ragged D).
    N3p = ((N3 + 127) // 128) * 128
    if N3p != N3:
        w_stream = jnp.pad(w_stream, ((0, N3p - N3), (0, 0)))
        bias_p = jnp.pad(bias, (0, N3p - N3))
    else:
        bias_p = bias
    bias2 = bias_p.reshape(N3p, 1)

    nsteps = _choose_col_steps(N3p, D, jnp.dtype(w_stream.dtype).itemsize,
                               budgets["k1_w"])
    tn = N3p // nsteps

    mod_t = pl.pallas_call(
        _modulation_kernel,
        out_shape=jax.ShapeDtypeStruct((N3p, B), mod_dtype),
        grid=(nsteps,),
        in_specs=[
            pl.BlockSpec((D, B), lambda n: (0, 0)),      # SiLU(emb)^T, resident
            pl.BlockSpec((tn, D), lambda n: (n, 0)),     # weight slab
            pl.BlockSpec((tn, 1), lambda n: (n, 0)),     # bias slab
        ],
        out_specs=pl.BlockSpec((tn, B), lambda n: (n, 0)),
        compiler_params=pltpu.CompilerParams(
            dimension_semantics=("parallel",),
            vmem_limit_bytes=budgets["limit"]),
    )(silu_t, w_stream, bias2)

    # Tiny XLA slices/transposes of the (3D, B) modulation (few KiB each).
    shift = jnp.transpose(mod_t[0:D, :])[:, None, :]        # (B, 1, D)
    scale = jnp.transpose(mod_t[D:2 * D, :])[:, None, :]    # (B, 1, D)
    gate = jnp.transpose(mod_t[2 * D:N3, :])                # (B, D)

    ts = _choose_seq_tile(B, S, D, jnp.dtype(x.dtype).itemsize, budgets["k2_x"])
    x_out = pl.pallas_call(
        _norm_modulate_kernel,
        out_shape=jax.ShapeDtypeStruct((B, S, D), x.dtype),
        grid=(B, S // ts),
        in_specs=[
            pl.BlockSpec((1, ts, D), lambda b, s: (b, s, 0)),
            pl.BlockSpec((1, 1, D), lambda b, s: (b, 0, 0)),  # shift, resident per b
            pl.BlockSpec((1, 1, D), lambda b, s: (b, 0, 0)),  # scale, resident per b
        ],
        out_specs=pl.BlockSpec((1, ts, D), lambda b, s: (b, s, 0)),
        compiler_params=pltpu.CompilerParams(
            dimension_semantics=("parallel", "parallel"),
            vmem_limit_bytes=budgets["limit"]),
    )(x, shift, scale)

    return x_out, gate


if __name__ == "__main__":
    key = jax.random.PRNGKey(0)
    B, S, D = 2, 8, 32
    k1, k2, k3, k4 = jax.random.split(key, 4)

    x = jax.random.normal(k1, (B, S, D), dtype=jnp.float32)
    emb = jax.random.normal(k2, (B, D), dtype=jnp.float32)
    # nn.Linear(D, 3D, bias=True) parameter shapes.
    weight = jax.random.normal(k3, (3 * D, D), dtype=jnp.float32) * 0.02
    bias = jax.random.normal(k4, (3 * D,), dtype=jnp.float32) * 0.02

    x_out, gate = ada_layer_norm_zero_single(x, emb, weight, bias)
    jax.block_until_ready((x_out, gate))

    # Pure-JAX reference (same semantics as the PyTorch forward).
    silu = emb * jax.nn.sigmoid(emb)
    mod_ref = silu @ weight.T + bias
    shift_r, scale_r, gate_r = jnp.split(mod_ref, 3, axis=1)
    mean = jnp.mean(x, axis=-1, keepdims=True)
    var = jnp.mean((x - mean) ** 2, axis=-1, keepdims=True)
    xn = (x - mean) / jnp.sqrt(var + 1e-6)
    x_ref = xn * (1.0 + scale_r[:, None]) + shift_r[:, None]

    assert jnp.allclose(x_out, x_ref, atol=1e-4, rtol=1e-4), "x mismatch"
    assert jnp.allclose(gate, gate_r, atol=1e-4, rtol=1e-4), "gate mismatch"
    print("KERNEL_OK")
</pallas_src>

<mosaic_0001>
module attributes {stable_mosaic.version = 11 : i64} {
  func.func @_modulation_kernel(%arg0: i32, %arg1: memref<32x2xf32, #tpu.memory_space<vmem>>, %arg2: memref<128x32xf32, #tpu.memory_space<vmem>>, %arg3: memref<128x1xf32, #tpu.memory_space<vmem>>, %arg4: memref<128x2xf32, #tpu.memory_space<vmem>>) attributes {dimension_semantics = [#tpu.dimension_semantics<parallel>], iteration_bounds = array<i64: 1>, scalar_prefetch = 0 : i64, scratch_operands = 0 : i64, tpu.core_type = #tpu.core_type<tc>, window_params = [{pipeline_mode = #tpu.pipeline_mode<synchronous>, transform_indices = @transform_0, window_bounds = array<i64: 32, 2>}, {transform_indices = @transform_1, window_bounds = array<i64: 128, 32>}, {transform_indices = @transform_2, window_bounds = array<i64: 128, 1>}, {transform_indices = @transform_3, window_bounds = array<i64: 128, 2>}]} {
    %c0 = arith.constant 0 : index
    %c0_0 = arith.constant 0 : index
    %0 = vector.load %arg2[%c0, %c0_0] : memref<128x32xf32, #tpu.memory_space<vmem>>, vector<128x32xf32>
    %c0_1 = arith.constant 0 : index
    %c0_2 = arith.constant 0 : index
    %1 = vector.load %arg1[%c0_1, %c0_2] : memref<32x2xf32, #tpu.memory_space<vmem>>, vector<32x2xf32>
    %cst = arith.constant dense<0.000000e+00> : vector<128x2xf32>
    %2 = tpu.matmul %0, %1, %cst {dimension_numbers = #tpu.dot_dimension_numbers<[1], [0], [0], [1], [0, 0, 1, 1], [], []>} : vector<128x32xf32>, vector<32x2xf32>, vector<128x2xf32> -> vector<128x2xf32>
    %c0_3 = arith.constant 0 : index
    %c0_4 = arith.constant 0 : index
    %3 = vector.load %arg3[%c0_3, %c0_4] : memref<128x1xf32, #tpu.memory_space<vmem>>, vector<128x1xf32>
    %4 = vector.broadcast %3 : vector<128x1xf32> to vector<128x2xf32>
    %5 = arith.addf %2, %4 : vector<128x2xf32>
    %c0_5 = arith.constant 0 : index
    %c0_6 = arith.constant 0 : index
    %6 = vector.load %arg4[%c0_5, %c0_6] : memref<128x2xf32, #tpu.memory_space<vmem>>, vector<128x2xf32>
    tpu.vector_store %arg4[%c0_5, %c0_6], %5 {strides = array<i32>} : memref<128x2xf32, #tpu.memory_space<vmem>>, vector<128x2xf32>,
    return
  }
  func.func @transform_0(%arg0: i32) -> (i32, i32) {
    %c0_i32 = arith.constant 0 : i32
    %c0_i32_0 = arith.constant 0 : i32
    %c0_i32_1 = arith.constant 0 : i32
    return %c0_i32, %c0_i32_0 : i32, i32
  }
  func.func @transform_1(%arg0: i32) -> (i32, i32) {
    %c0_i32 = arith.constant 0 : i32
    %c0_i32_0 = arith.constant 0 : i32
    return %arg0, %c0_i32 : i32, i32
  }
  func.func @transform_2(%arg0: i32) -> (i32, i32) {
    %c0_i32 = arith.constant 0 : i32
    %c0_i32_0 = arith.constant 0 : i32
    return %arg0, %c0_i32 : i32, i32
  }
  func.func @transform_3(%arg0: i32) -> (i32, i32) {
    %c0_i32 = arith.constant 0 : i32
    %c0_i32_0 = arith.constant 0 : i32
    return %arg0, %c0_i32 : i32, i32
  }
}

</mosaic_0001>

<llo_original>
// kernel: tpu_custom_call.1
$region0: #{tpu_custom_call.1}
  #allocation0 [shape = 'u32[]', space=smem, size = 0x4, offset = 0x4, fixed_abs, tag = 'smem constant byte address 0x4 - core index']
  #allocation1 [shape = 'u32[72,128]{1,0:T(1,128)}', space=vmem, size = 0x9000, scoped, tag = 'internal scratch']
  %s0 = inlined_call_operand.vmem [shape: f32[32,2], index: 0, kind: input, shape index: {}]
  %s1 = inlined_call_operand.vmem [shape: f32[128,32], index: 1, kind: input, shape index: {}]
  %s2 = inlined_call_operand.vmem [shape: f32[128,1], index: 2, kind: input, shape index: {}]
  %s3 = inlined_call_operand.vmem [shape: f32[128,2], index: 3, kind: output, shape index: {}]
  %s4 = sld [smem:[#allocation0]]
  $region22: #{tpu_custom_call.1} parent=0
    _
  %s6 = ssub.s32 1, %s4
  %s7 = scalar_select 0, %s6, %s4
  // Predicated region
  $region2: #{tpu_custom_call.1} parent=0 // pred_check
    _
  $region3: #{tpu_custom_call.1} parent=0 // pred_check_branch
    %9 = sbr.rel (0) target = $region5
  $region4: #{tpu_custom_call.1} parent=0 // pred_region
    _
  $region5: #{tpu_custom_call.1} parent=0 // pred_fallthru
    _
  // Predicated region
  $region6: #{tpu_custom_call.1} parent=0 // pred_check
    _
  $region7: #{tpu_custom_call.1} parent=0 // pred_check_branch
    %11 = sbr.rel (0) target = $region9
  $region8: #{tpu_custom_call.1} parent=0 // pred_region
    _
  $region9: #{tpu_custom_call.1} parent=0 // pred_fallthru
    _
  // Predicated region
  $region10: #{tpu_custom_call.1} parent=0 // pred_check
    _
  $region11: #{tpu_custom_call.1} parent=0 // pred_check_branch
    %13 = sbr.rel (0) target = $region13
  $region12: #{tpu_custom_call.1} parent=0 // pred_region
    _
  $region13: #{tpu_custom_call.1} parent=0 // pred_fallthru
    _
  %v14 = vld [vmem:[%s1] sm:$0xff]
  %v15 = vld [vmem:[%s1 + $0x8] sm:$0xff]
  %v16 = vld [vmem:[%s1 + $0x10] sm:$0xff]
  %v17 = vld [vmem:[%s1 + $0x18] sm:$0xff]
  %v18 = vld [vmem:[%s1 + $0x20] sm:$0xff]
  %v19 = vld [vmem:[%s1 + $0x28] sm:$0xff]
  %v20 = vld [vmem:[%s1 + $0x30] sm:$0xff]
  %v21 = vld [vmem:[%s1 + $0x38] sm:$0xff]
  %v22 = vld [vmem:[%s1 + $0x40] sm:$0xff]
  %v23 = vld [vmem:[%s1 + $0x48] sm:$0xff]
  %v24 = vld [vmem:[%s1 + $0x50] sm:$0xff]
  %v25 = vld [vmem:[%s1 + $0x58] sm:$0xff]
  %v26 = vld [vmem:[%s1 + $0x60] sm:$0xff]
  %v27 = vld [vmem:[%s1 + $0x68] sm:$0xff]
  %v28 = vld [vmem:[%s1 + $0x70] sm:$0xff]
  %v29 = vld [vmem:[%s1 + $0x78] sm:$0xff]
  %v30 = vld [vmem:[%s0] sm:$0xff]
  %v31 = vld [vmem:[%s0 + $0x8] sm:$0xff]
  %v32 = vld [vmem:[%s0 + $0x10] sm:$0xff]
  %v33 = vld [vmem:[%s0 + $0x18] sm:$0xff]
  %v34 = vld [vmem:[%s2] sm:$0xff]
  %v35 = vld [vmem:[%s2 + $0x8] sm:$0xff]
  %v36 = vld [vmem:[%s2 + $0x10] sm:$0xff]
  %v37 = vld [vmem:[%s2 + $0x18] sm:$0xff]
  %v38 = vld [vmem:[%s2 + $0x20] sm:$0xff]
  %v39 = vld [vmem:[%s2 + $0x28] sm:$0xff]
  %v40 = vld [vmem:[%s2 + $0x30] sm:$0xff]
  %v41 = vld [vmem:[%s2 + $0x38] sm:$0xff]
  %v42 = vld [vmem:[%s2 + $0x40] sm:$0xff]
  %v43 = vld [vmem:[%s2 + $0x48] sm:$0xff]
  %v44 = vld [vmem:[%s2 + $0x50] sm:$0xff]
  %v45 = vld [vmem:[%s2 + $0x58] sm:$0xff]
  %v46 = vld [vmem:[%s2 + $0x60] sm:$0xff]
  %v47 = vld [vmem:[%s2 + $0x68] sm:$0xff]
  %v48 = vld [vmem:[%s2 + $0x70] sm:$0xff]
  %v49 = vld [vmem:[%s2 + $0x78] sm:$0xff]
  %51 = vset.pattern.permute.xlu0 0
  %52 = vperm.xlu0 %51, %v34
  %v53 = vpop.permute.xlu0 %52
  %56 = vset.pattern.permute.xlu0 0
  %57 = vperm.xlu0 %56, %v35
  %v58 = vpop.permute.xlu0 %57
  %61 = vset.pattern.permute.xlu0 0
  %62 = vperm.xlu0 %61, %v36
  %v63 = vpop.permute.xlu0 %62
  %66 = vset.pattern.permute.xlu0 0
  %67 = vperm.xlu0 %66, %v37
  %v68 = vpop.permute.xlu0 %67
  %71 = vset.pattern.permute.xlu0 0
  %72 = vperm.xlu0 %71, %v38
  %v73 = vpop.permute.xlu0 %72
  %76 = vset.pattern.permute.xlu0 0
  %77 = vperm.xlu0 %76, %v39
  %v78 = vpop.permute.xlu0 %77
  %81 = vset.pattern.permute.xlu0 0
  %82 = vperm.xlu0 %81, %v40
  %v83 = vpop.permute.xlu0 %82
  %86 = vset.pattern.permute.xlu0 0
  %87 = vperm.xlu0 %86, %v41
  %v88 = vpop.permute.xlu0 %87
  %91 = vset.pattern.permute.xlu0 0
  %92 = vperm.xlu0 %91, %v42
  %v93 = vpop.permute.xlu0 %92
  %96 = vset.pattern.permute.xlu0 0
  %97 = vperm.xlu0 %96, %v43
  %v98 = vpop.permute.xlu0 %97
  %101 = vset.pattern.permute.xlu0 0
  %102 = vperm.xlu0 %101, %v44
  %v103 = vpop.permute.xlu0 %102
  %106 = vset.pattern.permute.xlu0 0
  %107 = vperm.xlu0 %106, %v45
  %v108 = vpop.permute.xlu0 %107
  %111 = vset.pattern.permute.xlu0 0
  %112 = vperm.xlu0 %111, %v46
  %v113 = vpop.permute.xlu0 %112
  %116 = vset.pattern.permute.xlu0 0
  %117 = vperm.xlu0 %116, %v47
  %v118 = vpop.permute.xlu0 %117
  %121 = vset.pattern.permute.xlu0 0
  %122 = vperm.xlu0 %121, %v48
  %v123 = vpop.permute.xlu0 %122
  %126 = vset.pattern.permute.xlu0 0
  %127 = vperm.xlu0 %126, %v49
  %v128 = vpop.permute.xlu0 %127
  %vm130 = vcmask 261120
  %v132 = vsel %vm130, %v14, 0
  %v135 = vsel %vm130, %v15, 0
  %v138 = vsel %vm130, %v16, 0
  %v141 = vsel %vm130, %v17, 0
  %v144 = vsel %vm130, %v18, 0
  %v147 = vsel %vm130, %v19, 0
  %v150 = vsel %vm130, %v20, 0
  %v153 = vsel %vm130, %v21, 0
  %v156 = vsel %vm130, %v22, 0
  %v159 = vsel %vm130, %v23, 0
  %v162 = vsel %vm130, %v24, 0
  %v165 = vsel %vm130, %v25, 0
  %v168 = vsel %vm130, %v26, 0
  %v171 = vsel %vm130, %v27, 0
  %v174 = vsel %vm130, %v28, 0
  %v177 = vsel %vm130, %v29, 0
  %179 = vmatpush.msra.mxu0 0.0
  %180 = vmatpush.msra.mxu0 0.0
  %181 = vmatpush.msra.mxu0 0.0
  %182 = vmatpush.msra.mxu0 0.0
  %183 = vmatpush.msra.mxu0 0.0
  %184 = vmatpush.msra.mxu0 0.0
  %185 = vmatpush.msra.mxu0 0.0
  %186 = vmatpush.msra.mxu0 0.0
  %187 = vmatpush.msra.mxu0 0.0
  %188 = vmatpush.msra.mxu0 0.0
  %189 = vmatpush.msra.mxu0 0.0
  %190 = vmatpush.msra.mxu0 0.0
  %191 = vmatpush.msra.mxu0 %v33
  %192 = vmatpush.msra.mxu0 %v32
  %193 = vmatpush.msra.mxu0 %v31
  %194 = vmatpush.msra.mxu0 %v30
  %195 = vmatmul.f32.gmra.mxu0 %v132
  %v196 = vpop.f32.mrf.mxu0
  %v197 = vadd.f32 %v53, %v196
  %198 = vmatmul.f32.gmra.mxu0 %v135
  %v199 = vpop.f32.mrf.mxu0
  %v200 = vadd.f32 %v58, %v199
  %201 = vmatmul.f32.gmra.mxu0 %v138
  %v202 = vpop.f32.mrf.mxu0
  %v203 = vadd.f32 %v63, %v202
  %204 = vmatmul.f32.gmra.mxu0 %v141
  %v205 = vpop.f32.mrf.mxu0
  %v206 = vadd.f32 %v68, %v205
  %207 = vmatmul.f32.gmra.mxu0 %v144
  %v208 = vpop.f32.mrf.mxu0
  %v209 = vadd.f32 %v73, %v208
  %210 = vmatmul.f32.gmra.mxu0 %v147
  %v211 = vpop.f32.mrf.mxu0
  %v212 = vadd.f32 %v78, %v211
  %213 = vmatmul.f32.gmra.mxu0 %v150
  %v214 = vpop.f32.mrf.mxu0
  %v215 = vadd.f32 %v83, %v214
  %216 = vmatmul.f32.gmra.mxu0 %v153
  %v217 = vpop.f32.mrf.mxu0
  %v218 = vadd.f32 %v88, %v217
  %219 = vmatmul.f32.gmra.mxu0 %v156
  %v220 = vpop.f32.mrf.mxu0
  %v221 = vadd.f32 %v93, %v220
  %222 = vmatmul.f32.gmra.mxu0 %v159
  %v223 = vpop.f32.mrf.mxu0
  %v224 = vadd.f32 %v98, %v223
  %225 = vmatmul.f32.gmra.mxu0 %v162
  %v226 = vpop.f32.mrf.mxu0
  %v227 = vadd.f32 %v103, %v226
  %228 = vmatmul.f32.gmra.mxu0 %v165
  %v229 = vpop.f32.mrf.mxu0
  %v230 = vadd.f32 %v108, %v229
  %231 = vmatmul.f32.gmra.mxu0 %v168
  %v232 = vpop.f32.mrf.mxu0
  %v233 = vadd.f32 %v113, %v232
  %234 = vmatmul.f32.gmra.mxu0 %v171
  %v235 = vpop.f32.mrf.mxu0
  %v236 = vadd.f32 %v118, %v235
  %237 = vmatmul.f32.gmra.mxu0 %v174
  %v238 = vpop.f32.mrf.mxu0
  %v239 = vadd.f32 %v123, %v238
  %240 = vmatmul.f32.gmra.mxu0 %v177
  %v241 = vpop.f32.mrf.mxu0
  %v242 = vadd.f32 %v128, %v241
  %243 = vdwg.mxu0
  %vm244 = vcmask 15360
  %245 = vst.msk [vmem:[%s3] sm:$0xff] %vm244, %v197
  %246 = vst.msk [vmem:[%s3 + $0x8] sm:$0xff] %vm244, %v200
  %247 = vst.msk [vmem:[%s3 + $0x10] sm:$0xff] %vm244, %v203
  %248 = vst.msk [vmem:[%s3 + $0x18] sm:$0xff] %vm244, %v206
  %249 = vst.msk [vmem:[%s3 + $0x20] sm:$0xff] %vm244, %v209
  %250 = vst.msk [vmem:[%s3 + $0x28] sm:$0xff] %vm244, %v212
  %251 = vst.msk [vmem:[%s3 + $0x30] sm:$0xff] %vm244, %v215
  %252 = vst.msk [vmem:[%s3 + $0x38] sm:$0xff] %vm244, %v218
  %253 = vst.msk [vmem:[%s3 + $0x40] sm:$0xff] %vm244, %v221
  %254 = vst.msk [vmem:[%s3 + $0x48] sm:$0xff] %vm244, %v224
  %255 = vst.msk [vmem:[%s3 + $0x50] sm:$0xff] %vm244, %v227
  %256 = vst.msk [vmem:[%s3 + $0x58] sm:$0xff] %vm244, %v230
  %257 = vst.msk [vmem:[%s3 + $0x60] sm:$0xff] %vm244, %v233
  %258 = vst.msk [vmem:[%s3 + $0x68] sm:$0xff] %vm244, %v236
  %259 = vst.msk [vmem:[%s3 + $0x70] sm:$0xff] %vm244, %v239
  %260 = vst.msk [vmem:[%s3 + $0x78] sm:$0xff] %vm244, %v242
  // Predicated region
  $region14: #{tpu_custom_call.1} parent=0 // pred_check
    _
  $region15: #{tpu_custom_call.1} parent=0 // pred_check_branch
    %262 = sbr.rel (0) target = $region17
  $region16: #{tpu_custom_call.1} parent=0 // pred_region
    _
  $region17: #{tpu_custom_call.1} parent=0 // pred_fallthru
    _
  // Predicated region
  $region18: #{tpu_custom_call.1} parent=0 // pred_check
    _
  $region19: #{tpu_custom_call.1} parent=0 // pred_check_branch
    %264 = sbr.rel (0) target = $region21
  $region20: #{tpu_custom_call.1} parent=0 // pred_region
    _
  $region21: #{tpu_custom_call.1} parent=0 // pred_fallthru
    _

</llo_original>
